<compile_context>
chip_gen: v6e
topology: v6e:2x2x1
jax: 0.10.0
libtpu: 0.0.40
codegen_flags: <defaults>
</compile_context>

<pallas_src>
import functools

import jax
import jax.numpy as jnp
from jax.experimental import pallas as pl
from jax.experimental.pallas import tpu as pltpu


def _round_up(x: int, m: int) -> int:
    return ((x + m - 1) // m) * m


def _readout_kernel(x_ref, w_ref, b_ref, o_ref, *, scale):
    # x_ref: (TM, D) bf16   w_ref: (D, TV) bf16   b_ref: (1, TV) f32   o_ref: (TM, TV)
    acc = jnp.dot(x_ref[...], w_ref[...], preferred_element_type=jnp.float32)
    acc = acc + b_ref[...]
    o_ref[...] = (jnp.float32(scale) * acc).astype(o_ref.dtype)


def _fused_readout(x_md, w_dv, b_1v, scale, *, tm, tv, out_dtype):
    m, d = x_md.shape
    v = w_dv.shape[1]
    grid_v = v // tv
    grid_m = m // tm

    kernel = functools.partial(_readout_kernel, scale=float(scale))

    # Advisory cost estimate: x is re-read once per V block (W stays resident).
    flops = 2 * m * d * v
    bytes_accessed = (
        x_md.size * x_md.dtype.itemsize * grid_v
        + w_dv.size * w_dv.dtype.itemsize
        + b_1v.size * b_1v.dtype.itemsize
        + m * v * jnp.dtype(out_dtype).itemsize
    )
    cost = pl.CostEstimate(
        flops=int(flops), transcendentals=0, bytes_accessed=int(bytes_accessed)
    )

    # Double-buffered per-tile VMEM footprint (bf16 x/w, f32 bias/out) + headroom.
    tile_bytes = 2 * (tm * d * 2 + d * tv * 2 + tv * 4 + tm * tv * 4)
    vmem_limit = int(min(max(4 * tile_bytes, 32 * 1024 * 1024), 48 * 1024 * 1024))

    return pl.pallas_call(
        kernel,
        out_shape=jax.ShapeDtypeStruct((m, v), out_dtype),
        # M innermost (fastest varying): the weight block index (0, j) does not
        # change across the inner loop, so Pallas skips re-DMAing W.
        grid=(grid_v, grid_m),
        in_specs=[
            pl.BlockSpec((tm, d), lambda j, i: (i, 0)),
            pl.BlockSpec((d, tv), lambda j, i: (0, j)),
            pl.BlockSpec((1, tv), lambda j, i: (0, j)),
        ],
        out_specs=pl.BlockSpec((tm, tv), lambda j, i: (i, j)),
        compiler_params=pltpu.CompilerParams(
            dimension_semantics=("parallel", "parallel"),
            vmem_limit_bytes=vmem_limit,
        ),
        cost_estimate=cost,
    )(x_md, w_dv, b_1v)


def multi_head_readout(
    hidden_state_ncd,
    params,
    output_logits_scale,
    *,
    compute_dtype=jnp.bfloat16,
    out_dtype=None,
    tm_target=256,
    tv_target=512,
):
    """params: dict key -> (w_dv, b_v) with w_dv = W.T of the nn.Linear."""
    n, c, d = hidden_state_ncd.shape
    if out_dtype is None:
        out_dtype = hidden_state_ncd.dtype
    m = n * c

    # --- fuse all heads along the vocab axis (each padded to a multiple of 128)
    keys = list(params.keys())
    w_blocks, b_blocks, offsets, vocabs = [], [], [], []
    off = 0
    for key in keys:
        w_dv, b_v = params[key]
        vk = w_dv.shape[1]
        vk_pad = _round_up(vk, 128)
        w_blocks.append(
            jnp.pad(w_dv.astype(compute_dtype), ((0, 0), (0, vk_pad - vk)))
        )
        b_blocks.append(jnp.pad(b_v.astype(jnp.float32), (0, vk_pad - vk)))
        offsets.append(off)
        vocabs.append(vk)
        off += vk_pad
    w_cat = jnp.concatenate(w_blocks, axis=1)
    b_cat = jnp.concatenate(b_blocks)[None, :]

    # --- tile sizes (multiples of (8, 128)); pad M and V so blocks divide evenly
    tm = min(tm_target, _round_up(m, 8))
    m_pad = _round_up(m, tm)
    v_total = w_cat.shape[1]
    tv = v_total if v_total <= tv_target else tv_target
    v_pad_total = _round_up(v_total, tv)

    x_md = hidden_state_ncd.reshape(m, d).astype(compute_dtype)
    if m_pad != m:
        x_md = jnp.pad(x_md, ((0, m_pad - m), (0, 0)))
    if v_pad_total != v_total:
        w_cat = jnp.pad(w_cat, ((0, 0), (0, v_pad_total - v_total)))
        b_cat = jnp.pad(b_cat, ((0, 0), (0, v_pad_total - v_total)))

    out_mv = _fused_readout(
        x_md, w_cat, b_cat, output_logits_scale, tm=tm, tv=tv, out_dtype=out_dtype
    )

    # --- slice the fused lane-dense output back into per-head logits
    out = {}
    for key, off_k, vk in zip(keys, offsets, vocabs):
        out[key] = out_mv[:m, off_k : off_k + vk].reshape(n, c, vk)
    return out


def init_params(key, categorical_token_size_dict, d_model, use_bias):
    """Deterministic synthetic initializer: normal(std=0.02) weights, zero bias
    (matches the module's _reset_parameters semantics for a normal heads_initializer)."""
    params = {}
    for name, vocab_size in categorical_token_size_dict.items():
        key, sub = jax.random.split(key)
        # PyTorch Linear weight is (vocab, d); store its transpose (d, vocab).
        w_dv = (0.02 * jax.random.normal(sub, (d_model, vocab_size))).astype(
            jnp.float32
        )
        b_v = jnp.zeros((vocab_size,), jnp.float32)
        # TODO(synk): if use_bias=False the PyTorch Linear has no bias tensor; a zero
        # bias is mathematically equivalent and kept for a uniform kernel signature.
        params[name] = (w_dv, b_v)
    return params


if __name__ == "__main__":
    n, c, d_model = 2, 8, 32
    categorical_token_size_dict = {"cell_type": 64, "assay": 16}
    output_logits_scale = 0.5
    use_bias = True

    key = jax.random.PRNGKey(0)
    key, xkey = jax.random.split(key)
    hidden_state_ncd = jax.random.normal(xkey, (n, c, d_model), dtype=jnp.float32)

    params = init_params(key, categorical_token_size_dict, d_model, use_bias)

    out = multi_head_readout(hidden_state_ncd, params, output_logits_scale)
    out = jax.tree_util.tree_map(jax.block_until_ready, out)

    # reference check (plain JAX, same bf16-input / f32-accumulate numerics)
    ok = True
    x_bf = hidden_state_ncd.reshape(n * c, d_model).astype(jnp.bfloat16)
    for name, (w_dv, b_v) in params.items():
        w_bf = w_dv.astype(jnp.bfloat16)
        ref = output_logits_scale * (
            jnp.dot(x_bf, w_bf, preferred_element_type=jnp.float32) + b_v
        )
        ref = ref.reshape(n, c, w_dv.shape[1])
        got = out[name]
        ok &= got.shape == (n, c, w_dv.shape[1])
        ok &= bool(
            jnp.allclose(
                got.astype(jnp.float32), ref.astype(jnp.float32), atol=2e-3, rtol=2e-3
            )
        )

    if ok:
        print("KERNEL_OK")
</pallas_src>

<mosaic_0001>
module attributes {stable_mosaic.version = 11 : i64} {
  func.func @_readout_kernel(%arg0: i32, %arg1: i32, %arg2: memref<16x32xbf16, #tpu.memory_space<vmem>>, %arg3: memref<32x256xbf16, #tpu.memory_space<vmem>>, %arg4: memref<1x256xf32, #tpu.memory_space<vmem>>, %arg5: memref<16x256xf32, #tpu.memory_space<vmem>>) attributes {dimension_semantics = [#tpu.dimension_semantics<parallel>, #tpu.dimension_semantics<parallel>], iteration_bounds = array<i64: 1, 1>, scalar_prefetch = 0 : i64, scratch_operands = 0 : i64, tpu.core_type = #tpu.core_type<tc>, window_params = [{transform_indices = @transform_0, window_bounds = array<i64: 16, 32>}, {transform_indices = @transform_1, window_bounds = array<i64: 32, 256>}, {transform_indices = @transform_2, window_bounds = array<i64: 1, 256>}, {transform_indices = @transform_3, window_bounds = array<i64: 16, 256>}]} {
    %c0 = arith.constant 0 : index
    %c0_0 = arith.constant 0 : index
    %0 = vector.load %arg2[%c0, %c0_0] : memref<16x32xbf16, #tpu.memory_space<vmem>>, vector<16x32xbf16>
    %c0_1 = arith.constant 0 : index
    %c0_2 = arith.constant 0 : index
    %1 = vector.load %arg3[%c0_1, %c0_2] : memref<32x256xbf16, #tpu.memory_space<vmem>>, vector<32x256xbf16>
    %cst = arith.constant dense<0.000000e+00> : vector<16x256xf32>
    %2 = tpu.matmul %0, %1, %cst {dimension_numbers = #tpu.dot_dimension_numbers<[1], [0], [0], [1], [0, 0, 1, 1], [], []>} : vector<16x32xbf16>, vector<32x256xbf16>, vector<16x256xf32> -> vector<16x256xf32>
    %c0_3 = arith.constant 0 : index
    %c0_4 = arith.constant 0 : index
    %3 = vector.load %arg4[%c0_3, %c0_4] : memref<1x256xf32, #tpu.memory_space<vmem>>, vector<1x256xf32>
    %4 = vector.broadcast %3 : vector<1x256xf32> to vector<16x256xf32>
    %5 = arith.addf %2, %4 : vector<16x256xf32>
    %cst_5 = arith.constant 5.000000e-01 : f32
    %6 = vector.broadcast %cst_5 : f32 to vector<16x256xf32>
    %7 = arith.mulf %6, %5 : vector<16x256xf32>
    %c0_6 = arith.constant 0 : index
    %c0_7 = arith.constant 0 : index
    %8 = vector.load %arg5[%c0_6, %c0_7] : memref<16x256xf32, #tpu.memory_space<vmem>>, vector<16x256xf32>
    tpu.vector_store %arg5[%c0_6, %c0_7], %7 {strides = array<i32>} : memref<16x256xf32, #tpu.memory_space<vmem>>, vector<16x256xf32>,
    return
  }
  func.func @transform_0(%arg0: i32, %arg1: i32) -> (i32, i32) {
    %c0_i32 = arith.constant 0 : i32
    %c0_i32_0 = arith.constant 0 : i32
    return %arg1, %c0_i32 : i32, i32
  }
  func.func @transform_1(%arg0: i32, %arg1: i32) -> (i32, i32) {
    %c0_i32 = arith.constant 0 : i32
    %c0_i32_0 = arith.constant 0 : i32
    return %c0_i32, %arg0 : i32, i32
  }
  func.func @transform_2(%arg0: i32, %arg1: i32) -> (i32, i32) {
    %c0_i32 = arith.constant 0 : i32
    %c0_i32_0 = arith.constant 0 : i32
    return %c0_i32, %arg0 : i32, i32
  }
  func.func @transform_3(%arg0: i32, %arg1: i32) -> (i32, i32) {
    %c0_i32 = arith.constant 0 : i32
    return %arg1, %arg0 : i32, i32
  }
}

</mosaic_0001>

<llo_original>
// kernel: tpu_custom_call.1
$region0: #{tpu_custom_call.1}
  #allocation0 [shape = 'u32[]', space=smem, size = 0x4, offset = 0x4, fixed_abs, tag = 'smem constant byte address 0x4 - core index']
  #allocation1 [shape = 'u32[144,128]{1,0:T(1,128)}', space=vmem, size = 0x12000, scoped, tag = 'internal scratch']
  %s0 = inlined_call_operand.hbm [shape: bf16[16,32], index: 0, kind: input, shape index: {}]
  %s1 = inlined_call_operand.hbm [shape: bf16[32,256], index: 1, kind: input, shape index: {}]
  %s2 = inlined_call_operand.vmem [shape: f32[1,256], index: 2, kind: input, shape index: {}]
  %s3 = inlined_call_operand.hbm [shape: f32[16,256], index: 3, kind: output, shape index: {}]
  %s4 = sld [smem:[#allocation0]]
  $region30: #{tpu_custom_call.1} parent=0
    _
  %s6 = ssub.s32 1, %s4
  %s7 = scalar_select 0, %s6, %s4
  $region1: #{tpu_custom_call.1} parent=0
    #allocation2 [shape = 'u8[4096]{0}', space=vmem, size = 0x1000, scoped, tag = 'input window, operand 0, single buffered']
    #allocation3 [shape = 's32[1]{0}', space=sflag, size = 0x4, scoped, tag = 'scoped memory for tpu_custom_call.1']
    #allocation4 [shape = 's32[1]{0}', space=sflag, size = 0x4, scoped, tag = 'scoped memory for tpu_custom_call.1']
    #allocation5 [shape = 'u8[16384]{0}', space=vmem, size = 0x4000, scoped, tag = 'input window, operand 1, single buffered']
    #allocation6 [shape = 's32[1]{0}', space=sflag, size = 0x4, scoped, tag = 'scoped memory for tpu_custom_call.1']
    #allocation7 [shape = 'u8[16384]{0}', space=vmem, size = 0x4000, scoped, tag = 'output window, operand 0, single buffered']
    %8 = vsyncpa [#allocation3], 0
    %9 = vsyncpa [#allocation6], 0
    %10 = vsyncpa [#allocation4], 0
    // Predicated region
    $region2: #{tpu_custom_call.1} parent=1 // pred_check
      _
    $region3: #{tpu_custom_call.1} parent=1 // pred_check_branch
      %12 = sbr.rel (0) target = $region5
    $region4: #{tpu_custom_call.1} parent=1 // pred_region
      %s14 = ssub.s32 128, 128
      %15 = vsyncadd [#allocation3], %s14
      %s16 = sshll.u32 [#allocation2], 4
      %s17 = int_to_ptr.vmem [resolvable:$true] %s16
      %22 = dma.hbm_to_vmem [thread:$0]  %s0, 128, %s17, [#allocation3], 64, 64, 4
    $region5: #{tpu_custom_call.1} parent=1 // pred_fallthru
      _
    // Predicated region
    $region6: #{tpu_custom_call.1} parent=1 // pred_check
      _
    $region7: #{tpu_custom_call.1} parent=1 // pred_check_branch
      %24 = sbr.rel (0) target = $region9
    $region8: #{tpu_custom_call.1} parent=1 // pred_region
      %s26 = ssub.s32 512, 512
      %27 = vsyncadd [#allocation6], %s26
      %s28 = sshll.u32 [#allocation5], 4
      %s29 = int_to_ptr.vmem [resolvable:$true] %s28
      %34 = dma.hbm_to_vmem [thread:$0]  %s1, 512, %s29, [#allocation6], 128, 128, 8
    $region9: #{tpu_custom_call.1} parent=1 // pred_fallthru
      _
    // Predicated region
    $region10: #{tpu_custom_call.1} parent=1 // pred_check
      _
    $region11: #{tpu_custom_call.1} parent=1 // pred_check_branch
      %36 = sbr.rel (0) target = $region13
    $region12: #{tpu_custom_call.1} parent=1 // pred_region
      _
    $region13: #{tpu_custom_call.1} parent=1 // pred_fallthru
      _
    // Predicated region
    $region14: #{tpu_custom_call.1} parent=1 // pred_check
      _
    $region15: #{tpu_custom_call.1} parent=1 // pred_check_branch
      %38 = sbr.rel (0) target = $region17
    $region16: #{tpu_custom_call.1} parent=1 // pred_region
      %39 = dma.done [#allocation3], 128
    $region17: #{tpu_custom_call.1} parent=1 // pred_fallthru
      _
    // Predicated region
    $region18: #{tpu_custom_call.1} parent=1 // pred_check
      _
    $region19: #{tpu_custom_call.1} parent=1 // pred_check_branch
      %41 = sbr.rel (0) target = $region21
    $region20: #{tpu_custom_call.1} parent=1 // pred_region
      %42 = dma.done [#allocation6], 512
    $region21: #{tpu_custom_call.1} parent=1 // pred_fallthru
      _
    %v44 = vld [vmem:[#allocation2] sm:$0xf]
    %v45 = vld [vmem:[#allocation2 + $0x4] sm:$0xf]
    %v46 = vld [vmem:[#allocation5] sm:$0xff]
    %v47 = vld [vmem:[#allocation5 + $0x8] sm:$0xff]
    %v48 = vld [vmem:[#allocation5 + $0x10] sm:$0xff]
    %v49 = vld [vmem:[#allocation5 + $0x18] sm:$0xff]
    %v50 = vld [vmem:[%s2] sm:$0x3]
    %v52 = vlaneseq
    %v53 = vshrl.u32 %v52, 7
    %v54 = vsub.s32 0, %v53
    %v55 = vrot.slane %v50, %v54
    %v56 = vlaneseq
    %v57 = vshrl.u32 %v56, 7
    %v58 = vsub.s32 1, %v57
    %v59 = vrot.slane %v50, %v58
    %v64 = vunpack.c.l.b16 %v44
    %v65 = vunpack.c.l.b16 %v45
    %v66 = vpack.c.b16 %v65, %v64
    %v71 = vunpack.c.l.b16 %v46
    %v72 = vunpack.c.h.b16 %v46
    %v73 = vunpack.c.l.b16 %v47
    %v74 = vunpack.c.h.b16 %v47
    %v75 = vunpack.c.l.b16 %v48
    %v76 = vunpack.c.h.b16 %v48
    %v77 = vunpack.c.l.b16 %v49
    %v78 = vunpack.c.h.b16 %v49
    %v79 = vpack.c.b16 %v73, %v71
    %v80 = vpack.c.b16 %v74, %v72
    %v81 = vpack.c.b16 %v77, %v75
    %v82 = vpack.c.b16 %v78, %v76
    %vm87 = vcmask 261120
    %v89 = vsel %vm87, %v66, 0
    %91 = vmatprep.subr.bf16.mxu0 0
    %92 = vmatpush1.bf16.msra.mxu0 0
    %93 = vmatprep.subr.bf16.mxu0 0
    %94 = vmatpush1.bf16.msra.mxu0 0
    %95 = vmatprep.subr.bf16.mxu0 0
    %96 = vmatpush1.bf16.msra.mxu0 0
    %97 = vmatprep.subr.bf16.mxu0 0
    %98 = vmatpush1.bf16.msra.mxu0 0
    %99 = vmatprep.subr.bf16.mxu0 0
    %100 = vmatpush1.bf16.msra.mxu0 0
    %101 = vmatprep.subr.bf16.mxu0 0
    %102 = vmatpush1.bf16.msra.mxu0 0
    %103 = vmatprep.subr.bf16.mxu0 %v82
    %104 = vmatpush1.bf16.msra.mxu0 %v81
    %105 = vmatprep.subr.bf16.mxu0 %v80
    %106 = vmatpush1.bf16.msra.mxu0 %v79
    %107 = vmatprep.subr.bf16.mxu0 0
    %108 = vmatpush2.bf16.msra.mxu0 0
    %109 = vmatprep.subr.bf16.mxu0 0
    %110 = vmatpush2.bf16.msra.mxu0 0
    %111 = vmatprep.subr.bf16.mxu0 0
    %112 = vmatpush2.bf16.msra.mxu0 0
    %113 = vmatprep.subr.bf16.mxu0 0
    %114 = vmatpush2.bf16.msra.mxu0 0
    %115 = vmatprep.subr.bf16.mxu0 0
    %116 = vmatpush2.bf16.msra.mxu0 0
    %117 = vmatprep.subr.bf16.mxu0 0
    %118 = vmatpush2.bf16.msra.mxu0 0
    %119 = vmatprep.subr.bf16.mxu0 0
    %120 = vmatpush2.bf16.msra.mxu0 0
    %121 = vmatprep.subr.bf16.mxu0 0
    %122 = vmatpush2.bf16.msra.mxu0 0
    %123 = vmatprep.mubr.bf16.mxu0 0
    %124 = vmatmul.mubr.bf16.gmra.mxu0 %v89
    %v125 = vpop.f32.mrf.mxu0
    %v126 = vadd.f32 %v55, %v125
    %v127 = vpop.f32.mrf.mxu0
    %v128 = vadd.f32 %v59, %v127
    %v129 = vpop.f32.mrf.mxu0
    %v130 = vadd.f32 %v55, %v129
    %v131 = vpop.f32.mrf.mxu0
    %v132 = vadd.f32 %v59, %v131
    %133 = vdwg.mxu0
    %v134 = vmul.f32 %v126, 0.5
    %v135 = vmul.f32 %v128, 0.5
    %v136 = vmul.f32 %v130, 0.5
    %v137 = vmul.f32 %v132, 0.5
    %138 = vst [vmem:[#allocation7] sm:$0xff] %v134
    %139 = vst [vmem:[#allocation7 + $0x8] sm:$0xff] %v135
    %140 = vst [vmem:[#allocation7 + $0x10] sm:$0xff] %v136
    %141 = vst [vmem:[#allocation7 + $0x18] sm:$0xff] %v137
    // Predicated region
    $region22: #{tpu_custom_call.1} parent=1 // pred_check
      _
    $region23: #{tpu_custom_call.1} parent=1 // pred_check_branch
      %143 = sbr.rel (0) target = $region25
    $region24: #{tpu_custom_call.1} parent=1 // pred_region
      %s145 = ssub.s32 512, 512
      %146 = vsyncadd [#allocation4], %s145
      %s147 = sshll.u32 [#allocation7], 4
      %s148 = int_to_ptr.vmem [resolvable:$true] %s147
      %153 = dma.vmem_to_hbm [thread:$0]  %s148, 512, %s3, [#allocation4], 256, 256, 16
    $region25: #{tpu_custom_call.1} parent=1 // pred_fallthru
      _
    // Predicated region
    $region26: #{tpu_custom_call.1} parent=1 // pred_check
      _
    $region27: #{tpu_custom_call.1} parent=1 // pred_check_branch
      %155 = sbr.rel (0) target = $region29
    $region28: #{tpu_custom_call.1} parent=1 // pred_region
      %156 = dma.done [#allocation4], 512
    $region29: #{tpu_custom_call.1} parent=1 // pred_fallthru
      _
    %157 = vsyncpa [#allocation3], 1
    %158 = vsyncpa [#allocation6], 1
    %159 = vsyncpa [#allocation4], 1

</llo_original>
